<compile_context>
chip_gen: v5e
topology: v5e:2x2
jax: 0.10.0
libtpu: 0.0.40
codegen_flags: <defaults>
</compile_context>

<pallas_src>
import functools

import jax
import jax.numpy as jnp
import numpy as np
from jax import lax
from jax.experimental import pallas as pl
from jax.experimental.pallas import tpu as pltpu


# ----------------------------------------------------------------------------
# Helpers
# ----------------------------------------------------------------------------
def _tile_params(h_out, tile_h):
    n_m = max(1, -(-h_out // tile_h))
    return n_m, n_m * tile_h


def _build_banded_weight(weight_np, w_in):
    """(Cout, Cin, KH, KW) -> banded (KH, W_in*Cin, W_out*Cout) f32.

    wb[kh, (w_i, ci), (w_o, co)] = weight[co, ci, kh, w_i - w_o] for
    0 <= w_i - w_o < KW, else 0.  One matmul per kh then computes the full
    KW x Cin contraction with a lane-dense (W_out*Cout) output.
    """
    cout, cin, kh_sz, kw_sz = weight_np.shape
    w_out = w_in - kw_sz + 1
    w_t = np.transpose(weight_np, (2, 3, 1, 0))  # (KH, KW, Cin, Cout)
    wb = np.zeros((kh_sz, w_in * cin, w_out * cout), np.float32)
    for kh in range(kh_sz):
        for w_o in range(w_out):
            for kw in range(kw_sz):
                w_i = w_o + kw
                wb[kh, w_i * cin:(w_i + 1) * cin,
                   w_o * cout:(w_o + 1) * cout] = w_t[kh, kw]
    return wb


# ----------------------------------------------------------------------------
# Pallas kernel: per (batch, row-tile) banded conv matmul + bias + row mask
# ----------------------------------------------------------------------------
def _make_streamconv_kernel(kh_size):
    def kernel(x_ref, w_ref, brow_ref, rk_ref, o_ref):
        # x_ref:    (1, KH, TILE_H, W*Cin)      bf16   (KH shifted row views)
        # w_ref:    (KH, W*Cin, W_out*Cout)     bf16   (banded, l/r mask folded)
        # brow_ref: (1, W_out*Cout)             f32    (bias, l/r mask folded)
        # rk_ref:   (TILE_H, 1)                 f32    (top/bottom 0/1 mask)
        # o_ref:    (1, TILE_H, W_out*Cout)     f32
        acc = jnp.dot(x_ref[0, 0], w_ref[0],
                      preferred_element_type=jnp.float32)
        for kh in range(1, kh_size):
            acc = acc + jnp.dot(x_ref[0, kh], w_ref[kh],
                                preferred_element_type=jnp.float32)
        out = (acc + brow_ref[...]) * rk_ref[...]
        o_ref[0] = out.astype(o_ref.dtype)
    return kernel


@functools.partial(jax.jit,
                   static_argnames=("kh_size", "w_out", "cout", "tile_h"))
def _stream_conv2d(x_nhwc, wb, brow, rowkeep, *, kh_size, w_out, cout, tile_h):
    """VALID stride-1 conv + bias + boundary zeroing.  NHWC in / NHWC out."""
    B, H, W, Cin = x_nhwc.shape
    K = W * Cin
    NL = w_out * cout
    H_out = H - kh_size + 1
    n_m, H_pad = _tile_params(H_out, tile_h)
    rows_needed = H_pad + kh_size - 1

    x2 = x_nhwc.reshape(B, H, K)                       # free: contiguous
    if rows_needed > H:
        x2 = jnp.pad(x2, ((0, 0), (0, rows_needed - H), (0, 0)))
    # KH shifted row views -> every in-kernel access is a tile-aligned
    # leading-dim index (no dynamic / unaligned sublane slicing).
    x_taps = jnp.stack([x2[:, kh:kh + H_pad, :] for kh in range(kh_size)],
                       axis=1).astype(jnp.bfloat16)    # (B, KH, H_pad, K)

    kernel = _make_streamconv_kernel(kh_size)
    flops = 2 * B * n_m * kh_size * tile_h * K * NL
    bytes_accessed = (x_taps.size * 2 + wb.size * 2 + brow.size * 4
                      + rowkeep.size * 4 + B * H_pad * NL * 4)

    out = pl.pallas_call(
        kernel,
        out_shape=jax.ShapeDtypeStruct((B, H_pad, NL), jnp.float32),
        grid=(B, n_m),
        in_specs=[
            pl.BlockSpec((1, kh_size, tile_h, K), lambda b, m: (b, 0, m, 0)),
            pl.BlockSpec((kh_size, K, NL), lambda b, m: (0, 0, 0)),
            pl.BlockSpec((1, NL), lambda b, m: (0, 0)),
            pl.BlockSpec((tile_h, 1), lambda b, m: (m, 0)),
        ],
        out_specs=pl.BlockSpec((1, tile_h, NL), lambda b, m: (b, m, 0)),
        compiler_params=pltpu.CompilerParams(
            dimension_semantics=("parallel", "parallel"),
            vmem_limit_bytes=32 * 1024 * 1024),
        cost_estimate=pl.CostEstimate(flops=flops, transcendentals=0,
                                      bytes_accessed=bytes_accessed),
    )(x_taps, wb, brow, rowkeep)

    out = out[:, :H_out, :].reshape(B, H_out, w_out, cout)   # NHWC
    return out


# ----------------------------------------------------------------------------
# Pure-JAX reference (NHWC, same bf16 input quantization as the kernel)
# ----------------------------------------------------------------------------
def conv2d_ref_nhwc(x_nhwc, w_oihw, bias, t, b, l, r):
    xq = x_nhwc.astype(jnp.bfloat16).astype(jnp.float32)
    wq = jnp.asarray(w_oihw, jnp.float32).astype(jnp.bfloat16).astype(jnp.float32)
    w_hwio = jnp.transpose(wq, (2, 3, 1, 0))
    out = lax.conv_general_dilated(
        xq, w_hwio, window_strides=(1, 1), padding='VALID',
        dimension_numbers=('NHWC', 'HWIO', 'NHWC'),
        precision=lax.Precision.HIGHEST)
    out = out + jnp.asarray(bias, jnp.float32).reshape(1, 1, 1, -1)
    if t > 0:
        out = out.at[:, :t, :, :].multiply(0.0)
    if b > 0:
        out = out.at[:, -b:, :, :].multiply(0.0)
    if l > 0:
        out = out.at[:, :, :l, :].multiply(0.0)
    if r > 0:
        out = out.at[:, :, -r:, :].multiply(0.0)
    return out


# ----------------------------------------------------------------------------
# StreamNet2D_S2: streaming buffer / halo combine logic (NHWC end-to-end)
# ----------------------------------------------------------------------------
class StreamNet2DS2:
    def __init__(self, weight, bias, n_patch, padding, e=0, use_pallas=True,
                 tile_h=8):
        assert tile_h % 8 == 0 and tile_h > 0
        self.weight = jnp.asarray(weight, jnp.float32)   # (Cout, Cin, KH, KW)
        self.bias = jnp.asarray(bias, jnp.float32)
        self.weight_np = np.asarray(weight, np.float32)
        self.bias_np = np.asarray(bias, np.float32)
        self.patch_id = None
        self.buf = {}
        self.ph = n_patch
        self.pw = n_patch
        self.padding = padding
        self.e = e
        self.use_pallas = use_pallas
        self.tile_h = tile_h
        self._band_cache = {}      # W_in -> banded weight (numpy f32)
        self._variant_cache = {}   # (H, W, l, r, t, b) -> device arrays

    # --- combine helpers (NHWC: axis 1 = H, axis 2 = W) ---
    def combine_xy(self, xy, patch_out):
        return jnp.concatenate([self.buf[xy], patch_out], axis=2)

    def combine_x(self, x, patch_out):
        return jnp.concatenate([self.buf[x], patch_out], axis=2)

    def combine_y(self, y, patch_out):
        return jnp.concatenate([self.buf[y], patch_out], axis=1)

    def output_padding(self, pad_l, pad_r, pad_t, pad_b):
        return pad_l // 2, pad_r // 2, pad_t // 2, pad_b // 2

    # --- per-(l,r,t,b) prepared kernel operands (built once, cached) ---
    def _prepare_variant(self, H, W, l, r, t, b):
        key = (H, W, l, r, t, b)
        if key in self._variant_cache:
            return self._variant_cache[key]
        cout, cin, kh_sz, kw_sz = self.weight_np.shape
        H_out = H - kh_sz + 1
        W_out = W - kw_sz + 1

        if W not in self._band_cache:
            self._band_cache[W] = _build_banded_weight(self.weight_np, W)
        wb = self._band_cache[W]                       # (KH, W*Cin, W_out*Cout)

        # Left/right boundary zeroing folded into weight + bias (exact).
        lane_keep = np.ones((W_out, cout), np.float32)
        if l > 0:
            lane_keep[:l, :] = 0.0
        if r > 0:
            lane_keep[W_out - r:, :] = 0.0
        lane_keep = lane_keep.reshape(-1)
        wb_v = jnp.asarray(wb * lane_keep[None, None, :], dtype=jnp.bfloat16)
        brow_v = jnp.asarray((np.tile(self.bias_np, W_out)
                              * lane_keep)[None, :], dtype=jnp.float32)

        # Top/bottom boundary zeroing as a tiny 0/1 row mask (constant data).
        _, H_pad = _tile_params(H_out, self.tile_h)
        row_keep = np.ones((H_pad, 1), np.float32)
        if t > 0:
            row_keep[:t, :] = 0.0
        if b > 0:
            row_keep[H_out - b:H_out, :] = 0.0
        row_keep[H_out:, :] = 0.0
        rk_v = jnp.asarray(row_keep)

        self._variant_cache[key] = (wb_v, brow_v, rk_v)
        return self._variant_cache[key]

    def compute_conv(self, x, l, r, t, b):
        l, r, t, b = self.output_padding(l, r, t, b)
        if not self.use_pallas:
            return conv2d_ref_nhwc(x, self.weight, self.bias, t, b, l, r)
        B, H, W, Cin = x.shape
        cout, _, kh_sz, kw_sz = self.weight_np.shape
        wb_v, brow_v, rk_v = self._prepare_variant(H, W, l, r, t, b)
        return _stream_conv2d(x, wb_v, brow_v, rk_v,
                              kh_size=kh_sz, w_out=W - kw_sz + 1,
                              cout=cout, tile_h=self.tile_h)

    def get_mem(self):
        # TODO(synk): PyTorch version prints buffer sizes / self.name; no compute.
        pass

    def forward(self, x):
        pid = self.patch_id
        ph = self.ph
        pw = self.pw
        row, col = (pid // ph, pid % pw)
        l = self.padding[0] if col == 0 else 0
        r = self.padding[1] if col == ph - 1 else 0
        t = self.padding[0] if row == 0 else 0
        b = self.padding[1] if row == pw - 1 else 0
        e = self.e
        if pid == 0:
            out = self.compute_conv(x, l, r, t, b)
            self.buf[f'{pid}_y'] = out[:, -2 + e:, :, :]
            self.buf[f'{pid}_x'] = out[:, :, -2 + e:, :]
            self.get_mem()
        elif row == 0 and col < pw - 1:
            out = self.compute_conv(x, l, r, t, b)
            out = self.combine_x(f'{col - 1}_x', out)
            self.buf[f'{pid}_y'] = out[:, -2 + e:, :, :]
            self.buf[f'{pid}_x'] = out[:, :, -2 + e:, :]
            self.get_mem()
            del self.buf[f'{col - 1}_x']
        elif row == 0 and col == pw - 1:
            out = self.compute_conv(x, l, r, t, b)
            out = self.combine_x(f'{col - 1}_x', out)
            self.buf[f'{pid}_y'] = out[:, -2 + e:, :, :]
            self.get_mem()
            del self.buf[f'{col - 1}_x']
        elif col == 0 and row < ph - 1:
            out = self.compute_conv(x, l, r, t, b)
            self.buf[f'{pid}_xy'] = out[:, :, -2 + e:, :]
            out = self.combine_y(f'{(row - 1) * pw}_y', out)
            self.buf[f'{pid}_y'] = out[:, -2 + e:, :, :]
            self.get_mem()
            del self.buf[f'{(row - 1) * pw}_y']
        elif col == 0 and row == ph - 1:
            out = self.compute_conv(x, l, r, t, b)
            self.buf[f'{pid}_xy'] = out[:, :, -2 + e:, :]
            out = self.combine_y(f'{(row - 1) * pw}_y', out)
            self.get_mem()
            del self.buf[f'{(row - 1) * pw}_y']
        elif row < ph - 1 and col < pw - 1:
            out = self.compute_conv(x, l, r, t, b)
            out = self.combine_xy(f'{row * pw + col - 1}_xy', out)
            self.buf[f'{pid}_xy'] = out[:, :, -2 + e:, :]
            out = self.combine_y(f'{(row - 1) * pw + col}_y', out)
            self.buf[f'{pid}_y'] = out[:, -2 + e:, :, :]
            self.get_mem()
            del self.buf[f'{row * pw + col - 1}_xy']
            del self.buf[f'{(row - 1) * pw + col}_y']
        elif row == ph - 1 and col < pw - 1:
            out = self.compute_conv(x, l, r, t, b)
            out = self.combine_xy(f'{row * pw + col - 1}_xy', out)
            self.buf[f'{pid}_xy'] = out[:, :, -2 + e:, :]
            out = self.combine_y(f'{(row - 1) * pw + col}_y', out)
            self.get_mem()
            del self.buf[f'{row * pw + col - 1}_xy']
            del self.buf[f'{(row - 1) * pw + col}_y']
        elif col == pw - 1 and row < ph - 1:
            out = self.compute_conv(x, l, r, t, b)
            out = self.combine_xy(f'{row * pw + col - 1}_xy', out)
            out = self.combine_y(f'{(row - 1) * pw + col}_y', out)
            self.buf[f'{pid}_y'] = out[:, -2 + e:, :, :]
            self.get_mem()
            del self.buf[f'{row * pw + col - 1}_xy']
            del self.buf[f'{(row - 1) * pw + col}_y']
        else:
            out = self.compute_conv(x, l, r, t, b)
            out = self.combine_xy(f'{row * pw + col - 1}_xy', out)
            out = self.combine_y(f'{(row - 1) * pw + col}_y', out)
            self.get_mem()
            del self.buf[f'{row * pw + col - 1}_xy']
            del self.buf[f'{(row - 1) * pw + col}_y']
            assert len(self.buf) == 0, 'buffering error'
        return out


# ----------------------------------------------------------------------------
if __name__ == "__main__":
    key = jax.random.PRNGKey(0)
    k_x, k_w, k_b = jax.random.split(key, 3)

    # Small deterministic config consistent with the module.
    B, Cin, Cout = 2, 4, 8
    res, n_patch = 32, 2
    KH = KW = 3
    patch_sz = res // n_patch  # 16 -> per-patch input: (2, 16, 16, 4) NHWC

    x_full_nchw = jax.random.normal(k_x, (B, Cin, res, res), dtype=jnp.float32)
    weight = jax.random.normal(k_w, (Cout, Cin, KH, KW), dtype=jnp.float32) * 0.1
    bias = jax.random.normal(k_b, (Cout,), dtype=jnp.float32) * 0.1

    # Single layout conversion at ingest; everything downstream is NHWC.
    x_full = jnp.transpose(x_full_nchw, (0, 2, 3, 1))

    net_pallas = StreamNet2DS2(weight, bias, n_patch, padding=(2, 2), e=0,
                               use_pallas=True)
    net_ref = StreamNet2DS2(weight, bias, n_patch, padding=(2, 2), e=0,
                            use_pallas=False)

    ok = True
    for pid in range(n_patch * n_patch):
        row, col = divmod(pid, n_patch)
        x_patch = x_full[:,
                         row * patch_sz:(row + 1) * patch_sz,
                         col * patch_sz:(col + 1) * patch_sz, :]
        net_pallas.patch_id = pid
        net_ref.patch_id = pid
        out_pallas = jax.block_until_ready(net_pallas.forward(x_patch))
        out_ref = jax.block_until_ready(net_ref.forward(x_patch))
        if out_pallas.shape != out_ref.shape or not np.allclose(
                np.asarray(out_pallas), np.asarray(out_ref),
                rtol=1e-3, atol=1e-3):
            ok = False

    if not ok:
        raise SystemExit("KERNEL_MISMATCH")
    print("KERNEL_OK")
</pallas_src>

<mosaic_0001>
module attributes {stable_mosaic.version = 11 : i64} {
  func.func @kernel(%arg0: i32, %arg1: i32, %arg2: memref<1x3x8x64xbf16, #tpu.memory_space<vmem>>, %arg3: memref<3x64x112xbf16, #tpu.memory_space<vmem>>, %arg4: memref<1x112xf32, #tpu.memory_space<vmem>>, %arg5: memref<8x1xf32, #tpu.memory_space<vmem>>, %arg6: memref<1x8x112xf32, #tpu.memory_space<vmem>>) attributes {dimension_semantics = [#tpu.dimension_semantics<parallel>, #tpu.dimension_semantics<parallel>], iteration_bounds = array<i64: 2, 2>, scalar_prefetch = 0 : i64, scratch_operands = 0 : i64, tpu.core_type = #tpu.core_type<tc>, window_params = [{transform_indices = @transform_0, window_bounds = array<i64: 1, 3, 8, 64>}, {pipeline_mode = #tpu.pipeline_mode<synchronous>, transform_indices = @transform_1, window_bounds = array<i64: 3, 64, 112>}, {pipeline_mode = #tpu.pipeline_mode<synchronous>, transform_indices = @transform_2, window_bounds = array<i64: 1, 112>}, {transform_indices = @transform_3, window_bounds = array<i64: 8, 1>}, {transform_indices = @transform_4, window_bounds = array<i64: 1, 8, 112>}]} {
    %c0 = arith.constant 0 : index
    %c0_0 = arith.constant 0 : index
    %c0_1 = arith.constant 0 : index
    %c0_2 = arith.constant 0 : index
    %0 = vector.load %arg2[%c0, %c0_0, %c0_1, %c0_2] : memref<1x3x8x64xbf16, #tpu.memory_space<vmem>>, vector<1x1x8x64xbf16>
    %1 = vector.shape_cast %0 : vector<1x1x8x64xbf16> to vector<8x64xbf16>
    %c0_3 = arith.constant 0 : index
    %c0_4 = arith.constant 0 : index
    %c0_5 = arith.constant 0 : index
    %2 = vector.load %arg3[%c0_3, %c0_4, %c0_5] : memref<3x64x112xbf16, #tpu.memory_space<vmem>>, vector<1x64x112xbf16>
    %3 = vector.shape_cast %2 : vector<1x64x112xbf16> to vector<64x112xbf16>
    %cst = arith.constant dense<0.000000e+00> : vector<8x112xf32>
    %4 = tpu.matmul %1, %3, %cst {dimension_numbers = #tpu.dot_dimension_numbers<[1], [0], [0], [1], [0, 0, 1, 1], [], []>} : vector<8x64xbf16>, vector<64x112xbf16>, vector<8x112xf32> -> vector<8x112xf32>
    %c0_6 = arith.constant 0 : index
    %c1 = arith.constant 1 : index
    %c0_7 = arith.constant 0 : index
    %c0_8 = arith.constant 0 : index
    %5 = vector.load %arg2[%c0_6, %c1, %c0_7, %c0_8] : memref<1x3x8x64xbf16, #tpu.memory_space<vmem>>, vector<1x1x8x64xbf16>
    %6 = vector.shape_cast %5 : vector<1x1x8x64xbf16> to vector<8x64xbf16>
    %c1_9 = arith.constant 1 : index
    %c0_10 = arith.constant 0 : index
    %c0_11 = arith.constant 0 : index
    %7 = vector.load %arg3[%c1_9, %c0_10, %c0_11] : memref<3x64x112xbf16, #tpu.memory_space<vmem>>, vector<1x64x112xbf16>
    %8 = vector.shape_cast %7 : vector<1x64x112xbf16> to vector<64x112xbf16>
    %cst_12 = arith.constant dense<0.000000e+00> : vector<8x112xf32>
    %9 = tpu.matmul %6, %8, %cst_12 {dimension_numbers = #tpu.dot_dimension_numbers<[1], [0], [0], [1], [0, 0, 1, 1], [], []>} : vector<8x64xbf16>, vector<64x112xbf16>, vector<8x112xf32> -> vector<8x112xf32>
    %10 = arith.addf %4, %9 : vector<8x112xf32>
    %c0_13 = arith.constant 0 : index
    %c2 = arith.constant 2 : index
    %c0_14 = arith.constant 0 : index
    %c0_15 = arith.constant 0 : index
    %11 = vector.load %arg2[%c0_13, %c2, %c0_14, %c0_15] : memref<1x3x8x64xbf16, #tpu.memory_space<vmem>>, vector<1x1x8x64xbf16>
    %12 = vector.shape_cast %11 : vector<1x1x8x64xbf16> to vector<8x64xbf16>
    %c2_16 = arith.constant 2 : index
    %c0_17 = arith.constant 0 : index
    %c0_18 = arith.constant 0 : index
    %13 = vector.load %arg3[%c2_16, %c0_17, %c0_18] : memref<3x64x112xbf16, #tpu.memory_space<vmem>>, vector<1x64x112xbf16>
    %14 = vector.shape_cast %13 : vector<1x64x112xbf16> to vector<64x112xbf16>
    %cst_19 = arith.constant dense<0.000000e+00> : vector<8x112xf32>
    %15 = tpu.matmul %12, %14, %cst_19 {dimension_numbers = #tpu.dot_dimension_numbers<[1], [0], [0], [1], [0, 0, 1, 1], [], []>} : vector<8x64xbf16>, vector<64x112xbf16>, vector<8x112xf32> -> vector<8x112xf32>
    %16 = arith.addf %10, %15 : vector<8x112xf32>
    %c0_20 = arith.constant 0 : index
    %c0_21 = arith.constant 0 : index
    %17 = vector.load %arg4[%c0_20, %c0_21] : memref<1x112xf32, #tpu.memory_space<vmem>>, vector<1x112xf32>
    %18 = vector.broadcast %17 : vector<1x112xf32> to vector<8x112xf32>
    %19 = arith.addf %16, %18 : vector<8x112xf32>
    %c0_22 = arith.constant 0 : index
    %c0_23 = arith.constant 0 : index
    %20 = vector.load %arg5[%c0_22, %c0_23] : memref<8x1xf32, #tpu.memory_space<vmem>>, vector<8x1xf32>
    %21 = vector.broadcast %20 : vector<8x1xf32> to vector<8x112xf32>
    %22 = arith.mulf %19, %21 : vector<8x112xf32>
    %c0_24 = arith.constant 0 : index
    %c0_25 = arith.constant 0 : index
    %c0_26 = arith.constant 0 : index
    %23 = vector.load %arg6[%c0_24, %c0_25, %c0_26] : memref<1x8x112xf32, #tpu.memory_space<vmem>>, vector<1x8x112xf32>
    %24 = vector.shape_cast %23 : vector<1x8x112xf32> to vector<8x112xf32>
    %25 = vector.shape_cast %22 : vector<8x112xf32> to vector<1x8x112xf32>
    tpu.vector_store %arg6[%c0_24, %c0_25, %c0_26], %25 {strides = array<i32>} : memref<1x8x112xf32, #tpu.memory_space<vmem>>, vector<1x8x112xf32>,
    return
  }
  func.func @transform_0(%arg0: i32, %arg1: i32) -> (i32, i32, i32, i32) {
    %c0_i32 = arith.constant 0 : i32
    %c0_i32_0 = arith.constant 0 : i32
    %c0_i32_1 = arith.constant 0 : i32
    return %arg0, %c0_i32, %arg1, %c0_i32_0 : i32, i32, i32, i32
  }
  func.func @transform_1(%arg0: i32, %arg1: i32) -> (i32, i32, i32) {
    %c0_i32 = arith.constant 0 : i32
    %c0_i32_0 = arith.constant 0 : i32
    %c0_i32_1 = arith.constant 0 : i32
    %c0_i32_2 = arith.constant 0 : i32
    return %c0_i32, %c0_i32_0, %c0_i32_1 : i32, i32, i32
  }
  func.func @transform_2(%arg0: i32, %arg1: i32) -> (i32, i32) {
    %c0_i32 = arith.constant 0 : i32
    %c0_i32_0 = arith.constant 0 : i32
    %c0_i32_1 = arith.constant 0 : i32
    return %c0_i32, %c0_i32_0 : i32, i32
  }
  func.func @transform_3(%arg0: i32, %arg1: i32) -> (i32, i32) {
    %c0_i32 = arith.constant 0 : i32
    %c0_i32_0 = arith.constant 0 : i32
    return %arg1, %c0_i32 : i32, i32
  }
  func.func @transform_4(%arg0: i32, %arg1: i32) -> (i32, i32, i32) {
    %c0_i32 = arith.constant 0 : i32
    %c0_i32_0 = arith.constant 0 : i32
    return %arg0, %arg1, %c0_i32 : i32, i32, i32
  }
}

</mosaic_0001>

<llo_original>
// kernel: _stream_conv2d.1
$region0: #{_stream_conv2d.1}
  #allocation0 [shape = 'u32[]', space=smem, size = 0x4, offset = 0x4, fixed_abs, tag = 'smem constant byte address 0x4 - core index']
  #allocation1 [shape = 'u32[72,128]{1,0:T(1,128)}', space=vmem, size = 0x9000, scoped, tag = 'internal scratch']
  %s0 = inlined_call_operand.vmem [shape: bf16[2,3,16,64], index: 0, kind: input, shape index: {}]
  %s1 = inlined_call_operand.vmem [shape: bf16[3,64,112], index: 1, kind: input, shape index: {}]
  %s2 = inlined_call_operand.vmem [shape: f32[1,112], index: 2, kind: input, shape index: {}]
  %s3 = inlined_call_operand.vmem [shape: f32[16,1], index: 3, kind: input, shape index: {}]
  %s4 = inlined_call_operand.vmem [shape: f32[2,16,112], index: 4, kind: output, shape index: {}]
  %s5 = sld [smem:[#allocation0]]
  $region90: #{_stream_conv2d.1} parent=0
    _
  %s7 = ssub.s32 1, %s5
  %s8 = scalar_select 0, %s7, %s5
  $region1: #{_stream_conv2d.1} parent=0
    #allocation2 [shape = 'u8[12288]{0}', space=vmem, size = 0x3000, scoped, tag = 'input window, operand 0']
    loop: start=0, step=1, limit=6
    $region2: #{_stream_conv2d.1} parent=1 // loop_pre_header
      _
    $region3: #{_stream_conv2d.1} parent=1 // loop_header
      %s10 = sphi 0, %s14
      %p11 = scmp.ge.s32.totalorder %s10, 6
      %s17 = sphi 0, %s29
      %s18 = sphi 0, %s25
      %s19 = sphi 0, %s17
      %s20 = sphi 0, %s18
      %s21 = sphi 0, %s19
      %s22 = sphi 0, %s20
      %s34 = sphi 0, %s36
      %s37 = sphi 0, %s34
      %s38 = sphi 0, %s37
      %s54 = sphi 0, %s38
      %s58 = sphi 0, %s58
      %s60 = sphi 0, %s58
      %s61 = sphi 0, %s60
      %s75 = sphi 0, %s61
      %s79 = sphi 0, %s79
      %s81 = sphi 0, %s79
      %s82 = sphi 0, %s81
      %s96 = sphi 0, %s82
      %s102 = sphi 0, %s104
      %s105 = sphi 0, %s102
      %s106 = sphi 0, %s105
      %s122 = sphi 0, %s106
      %s130 = sphi 0, %s132
      %s133 = sphi 0, %s130
      %s134 = sphi 0, %s133
      %s150 = sphi 0, %s134
    $region4: #{_stream_conv2d.1} parent=1 // loop_header_branch
      %13 = sbr.rel (%p11) target = $region8
    $region5: #{_stream_conv2d.1} parent=1 // loop_body
      %s15 = ssub.s32 %s10, 1
      %s16 = ssub.s32 %s10, 2
      %s23 = sadd.s32 1, %s18
      %p24 = scmp.ge.s32.totalorder %s23, 2
      %s25 = scalar_select %p24, 0, %s23
      %s26 = sadd.s32 1, %s17
      %s27 = scalar_select %p24, %s26, %s17
      %p28 = scmp.ge.s32.totalorder %s27, 2
      %s29 = scalar_select %p28, 0, %s27
      %s30 = ssub.s32 %s17, %s29
      %s31 = ssub.s32 %s18, %s25
      %s32 = sor.u32 %s30, %s31
      %p33 = scmp.eq.s32.totalorder %s32, 0
      %s35 = sadd.s32 %s34, 1
      %s36 = scalar_select %p33, %s34, %s35
      %p39 = pneg %p33
      %p40 = scmp.eq.s32.totalorder %s10, 3
      %p41 = por %p39, %p40
      %p42 = scmp.ne.s32.totalorder %s34, %s37
      %p43 = scmp.eq.s32.totalorder %s10, 0
      %p44 = por %p42, %p43
      %p45 = scmp.ne.s32.totalorder %s34, %s37
      %p46 = scmp.eq.s32.totalorder %s15, 3
      %p47 = por %p45, %p46
      %p48 = scmp.ne.s32.totalorder %s37, %s38
      %p49 = scmp.eq.s32.totalorder %s15, 0
      %p50 = por %p48, %p49
      %p51 = scmp.ne.s32.totalorder %s37, %s38
      %p52 = scmp.eq.s32.totalorder %s16, 3
      %p53 = por %p51, %p52
      %p55 = scmp.ne.s32.totalorder %s38, %s54
      %p56 = scmp.eq.s32.totalorder %s16, 0
      %p57 = por %p55, %p56
      %s59 = sadd.s32 %s58, 1
      %p62 = scmp.eq.s32.totalorder %s10, 3
      %p63 = scmp.ne.s32.totalorder %s58, %s60
      %p64 = scmp.eq.s32.totalorder %s10, 0
      %p65 = por %p63, %p64
      %p66 = scmp.ne.s32.totalorder %s58, %s60
      %p67 = scmp.eq.s32.totalorder %s15, 3
      %p68 = por %p66, %p67
      %p69 = scmp.ne.s32.totalorder %s60, %s61
      %p70 = scmp.eq.s32.totalorder %s15, 0
      %p71 = por %p69, %p70
      %p72 = scmp.ne.s32.totalorder %s60, %s61
      %p73 = scmp.eq.s32.totalorder %s16, 3
      %p74 = por %p72, %p73
      %p76 = scmp.ne.s32.totalorder %s61, %s75
      %p77 = scmp.eq.s32.totalorder %s16, 0
      %p78 = por %p76, %p77
      %s80 = sadd.s32 %s79, 1
      %p83 = scmp.eq.s32.totalorder %s10, 3
      %p84 = scmp.ne.s32.totalorder %s79, %s81
      %p85 = scmp.eq.s32.totalorder %s10, 0
      %p86 = por %p84, %p85
      %p87 = scmp.ne.s32.totalorder %s79, %s81
      %p88 = scmp.eq.s32.totalorder %s15, 3
      %p89 = por %p87, %p88
      %p90 = scmp.ne.s32.totalorder %s81, %s82
      %p91 = scmp.eq.s32.totalorder %s15, 0
      %p92 = por %p90, %p91
      %p93 = scmp.ne.s32.totalorder %s81, %s82
      %p94 = scmp.eq.s32.totalorder %s16, 3
      %p95 = por %p93, %p94
      %p97 = scmp.ne.s32.totalorder %s82, %s96
      %p98 = scmp.eq.s32.totalorder %s16, 0
      %p99 = por %p97, %p98
      %s100 = ssub.s32 %s18, %s25
      %p101 = scmp.eq.s32.totalorder %s100, 0
      %s103 = sadd.s32 %s102, 1
      %s104 = scalar_select %p101, %s102, %s103
      %p107 = pneg %p101
      %p108 = scmp.eq.s32.totalorder %s10, 3
      %p109 = por %p107, %p108
      %p110 = scmp.ne.s32.totalorder %s102, %s105
      %p111 = scmp.eq.s32.totalorder %s10, 0
      %p112 = por %p110, %p111
      %p113 = scmp.ne.s32.totalorder %s102, %s105
      %p114 = scmp.eq.s32.totalorder %s15, 3
      %p115 = por %p113, %p114
      %p116 = scmp.ne.s32.totalorder %s105, %s106
      %p117 = scmp.eq.s32.totalorder %s15, 0
      %p118 = por %p116, %p117
      %p119 = scmp.ne.s32.totalorder %s105, %s106
      %p120 = scmp.eq.s32.totalorder %s16, 3
      %p121 = por %p119, %p120
      %p123 = scmp.ne.s32.totalorder %s106, %s122
      %p124 = scmp.eq.s32.totalorder %s16, 0
      %p125 = por %p123, %p124
      %s126 = ssub.s32 %s17, %s29
      %s127 = ssub.s32 %s18, %s25
      %s128 = sor.u32 %s126, %s127
      %p129 = scmp.eq.s32.totalorder %s128, 0
      %s131 = sadd.s32 %s130, 1
      %s132 = scalar_select %p129, %s130, %s131
      %p135 = pneg %p129
      %p136 = scmp.eq.s32.totalorder %s10, 3
      %p137 = por %p135, %p136
      %p138 = scmp.ne.s32.totalorder %s130, %s133
      %p139 = scmp.eq.s32.totalorder %s10, 0
      %p140 = por %p138, %p139
      %p141 = scmp.ne.s32.totalorder %s130, %s133
      %p142 = scmp.eq.s32.totalorder %s15, 3
      %p143 = por %p141, %p142
      %p144 = scmp.ne.s32.totalorder %s133, %s134
      %p145 = scmp.eq.s32.totalorder %s15, 0
      %p146 = por %p144, %p145
      %p147 = scmp.ne.s32.totalorder %s133, %s134
      %p148 = scmp.eq.s32.totalorder %s16, 3
      %p149 = por %p147, %p148
      %p151 = scmp.ne.s32.totalorder %s134, %s150
      %p152 = scmp.eq.s32.totalorder %s16, 0
      %p153 = por %p151, %p152
      %p154 = scmp.le.s32.totalorder 1, %s10
      %p155 = scmp.lt.s32.totalorder %s10, 5
      %p156 = pnand %p154, %p155
      %p157 = pneg %p156
      // Predicated region
      $region9: #{_stream_conv2d.1} parent=5 // pred_check
        _
      $region10: #{_stream_conv2d.1} parent=5 // pred_check_branch
        %159 = sbr.rel (%p156) target = $region12
      $region11: #{_stream_conv2d.1} parent=5 // pred_region
        %s160 = ssub.s32 %s10, 1
        // Predicated region
        $region13: #{_stream_conv2d.1} parent=11 // pred_check
          %p161 = pneg %p71
        $region14: #{_stream_conv2d.1} parent=11 // pred_check_branch
          %163 = sbr.rel (%p161) target = $region16
        $region15: #{_stream_conv2d.1} parent=11 // pred_region
          _
        $region16: #{_stream_conv2d.1} parent=11 // pred_fallthru
          _
        // Predicated region
        $region17: #{_stream_conv2d.1} parent=11 // pred_check
          %p164 = pneg %p92
        $region18: #{_stream_conv2d.1} parent=11 // pred_check_branch
          %166 = sbr.rel (%p164) target = $region20
        $region19: #{_stream_conv2d.1} parent=11 // pred_region
          _
        $region20: #{_stream_conv2d.1} parent=11 // pred_fallthru
          _
      $region12: #{_stream_conv2d.1} parent=5 // pred_fallthru
        _
      %p167 = scmp.lt.s32.totalorder %s10, 4
      // Predicated region
      $region21: #{_stream_conv2d.1} parent=5 // pred_check
        %p168 = pneg %p167
      $region22: #{_stream_conv2d.1} parent=5 // pred_check_branch
        %170 = sbr.rel (%p168) target = $region24
      $region23: #{_stream_conv2d.1} parent=5 // pred_region
        // Predicated region
        $region25: #{_stream_conv2d.1} parent=23 // pred_check
          %p171 = pneg %p44
        $region26: #{_stream_conv2d.1} parent=23 // pred_check_branch
          %173 = sbr.rel (%p171) target = $region28
        $region27: #{_stream_conv2d.1} parent=23 // pred_region
          %s174 = sand.u32 %s34, 1
          %s175 = sand.u32 %s34, 1
          %s176 = smul.addr %s175, 12
          %s177 = scalar_lea.vmem [#allocation2], %s176
          %s178 = smul.addr %s17, 6
          %s179 = sadd.s32 %s18, %s178
          %s180 = smul.addr %s179, 4
          %s181 = scalar_lea.vmem %s0, %s180
          // Predicated region
          $region29: #{_stream_conv2d.1} parent=27 // pred_check
            _
          $region30: #{_stream_conv2d.1} parent=27 // pred_check_branch
            %183 = sbr.rel (0) target = $region32
          $region31: #{_stream_conv2d.1} parent=27 // pred_region
            // Predicated region
            $region33: #{_stream_conv2d.1} parent=31 // pred_check
              _
            $region34: #{_stream_conv2d.1} parent=31 // pred_check_branch
              %185 = sbr.rel target = $region36
            $region35: #{_stream_conv2d.1} parent=31 // pred_region
              // Predicated region
              $region48: #{_stream_conv2d.1} parent=35 // pred_check
                _
              $region49: #{_stream_conv2d.1} parent=35 // pred_check_branch
                %205 = sbr.rel (0) target = $region51
              $region50: #{_stream_conv2d.1} parent=35 // pred_region
                loop: start=0, step=1, limit=1
                $region52: #{_stream_conv2d.1} parent=50 // loop_pre_header
                  _
                $region53: #{_stream_conv2d.1} parent=50 // loop_header
                  %s207 = sphi 0, %s211
                  %p208 = scmp.ge.s32.totalorder %s207, 1
                  %s212 = sphi %s181, %s181
                  %s213 = sphi %s177, %s177
                $region54: #{_stream_conv2d.1} parent=50 // loop_header_branch
                  %210 = sbr.rel (%p208) target = $region58
                $region55: #{_stream_conv2d.1} parent=50 // loop_body
                  _
                $region56: #{_stream_conv2d.1} parent=50 // loop_footer
                  %s211 = sadd.s32 1, %s207
                $region57: #{_stream_conv2d.1} parent=50 // loop_footer_branch
                  %206 = sbr.rel target = $region53
                $region58: #{_stream_conv2d.1} parent=50 // loop_exit
                  _
                %s215 = ssub.s32 16, 1
                loop: start=0, step=1, limit=1
                $region59: #{_stream_conv2d.1} parent=50 // loop_pre_header
                  _
                $region60: #{_stream_conv2d.1} parent=50 // loop_header
                  %s217 = sphi 0, %s221
                  %p218 = scmp.ge.s32.totalorder %s217, 1
                  %s222 = sphi %s181, %s181
                  %s223 = sphi %s177, %s177
                $region61: #{_stream_conv2d.1} parent=50 // loop_header_branch
                  %220 = sbr.rel (%p218) target = $region65
                $region62: #{_stream_conv2d.1} parent=50 // loop_body
                  %v224 = vld [vmem:[%s222] sm:%s215]
                  %225 = vst [vmem:[%s223] sm:%s215] %v224
                  %v226 = vld [vmem:[%s222 + $0x8] sm:%s215]
                  %227 = vst [vmem:[%s223 + $0x4] sm:%s215] %v226
                  %v228 = vld [vmem:[%s222 + $0x10] sm:%s215]
                  %229 = vst [vmem:[%s223 + $0x8] sm:%s215] %v228
                $region63: #{_stream_conv2d.1} parent=50 // loop_footer
                  %s221 = sadd.s32 1, %s217
                $region64: #{_stream_conv2d.1} parent=50 // loop_footer_branch
                  %216 = sbr.rel target = $region60
                $region65: #{_stream_conv2d.1} parent=50 // loop_exit
                  _
              $region51: #{_stream_conv2d.1} parent=35 // pred_fallthru
                _
            $region36: #{_stream_conv2d.1} parent=31 // pred_fallthru
              _
            // Predicated region
            $region37: #{_stream_conv2d.1} parent=31 // pred_check
              _
            $region38: #{_stream_conv2d.1} parent=31 // pred_check_branch
              %187 = sbr.rel (0) target = $region40
            $region39: #{_stream_conv2d.1} parent=31 // pred_region
              %s189 = ssub.s32 16, 1
              loop: start=0, step=1, limit=1
              $region41: #{_stream_conv2d.1} parent=39 // loop_pre_header
                _
              $region42: #{_stream_conv2d.1} parent=39 // loop_header
                %s191 = sphi 0, %s195
                %p192 = scmp.ge.s32.totalorder %s191, 1
                %s196 = sphi %s181, %s181
                %s197 = sphi %s177, %s177
              $region43: #{_stream_conv2d.1} parent=39 // loop_header_branch
                %194 = sbr.rel (%p192) target = $region47
              $region44: #{_stream_conv2d.1} parent=39 // loop_body
                %v198 = vld [vmem:[%s196] sm:%s189]
                %199 = vst [vmem:[%s197] sm:%s189] %v198
                %v200 = vld [vmem:[%s196 + $0x8] sm:%s189]
                %201 = vst [vmem:[%s197 + $0x4] sm:%s189] %v200
                %v202 = vld [vmem:[%s196 + $0x10] sm:%s189]
                %203 = vst [vmem:[%s197 + $0x8] sm:%s189] %v202
              $region45: #{_stream_conv2d.1} parent=39 // loop_footer
                %s195 = sadd.s32 1, %s191
              $region46: #{_stream_conv2d.1} parent=39 // loop_footer_branch
                %190 = sbr.rel target = $region42
              $region47: #{_stream_conv2d.1} parent=39 // loop_exit
                _
            $region40: #{_stream_conv2d.1} parent=31 // pred_fallthru
              _
          $region32: #{_stream_conv2d.1} parent=27 // pred_fallthru
            _
          %230 = vnop
        $region28: #{_stream_conv2d.1} parent=23 // pred_fallthru
          _
        // Predicated region
        $region66: #{_stream_conv2d.1} parent=23 // pred_check
          %p231 = pneg %p112
        $region67: #{_stream_conv2d.1} parent=23 // pred_check_branch
          %233 = sbr.rel (%p231) target = $region69
        $region68: #{_stream_conv2d.1} parent=23 // pred_region
          %p234 = scmp.lt.s32.totalorder %s18, 1
          %s235 = scalar_select %p234, %s18, 1
          %s236 = smul.addr %s235, 8
          %s237 = scalar_lea.vmem %s3, %s236
        $region69: #{_stream_conv2d.1} parent=23 // pred_fallthru
          _
      $region24: #{_stream_conv2d.1} parent=5 // pred_fallthru
        _
      %p238 = scmp.le.s32.totalorder 1, %s10
      %p239 = scmp.lt.s32.totalorder %s10, 5
      %p240 = pnand %p238, %p239
      %p241 = pneg %p240
      // Predicated region
      $region70: #{_stream_conv2d.1} parent=5 // pred_check
        _
      $region71: #{_stream_conv2d.1} parent=5 // pred_check_branch
        %243 = sbr.rel (%p240) target = $region73
      $region72: #{_stream_conv2d.1} parent=5 // pred_region
        %s244 = ssub.s32 %s10, 1
        %s245 = sand.u32 %s37, 1
        %s246 = sand.u32 %s37, 1
        %s247 = smul.addr %s246, 12
        %s248 = scalar_lea.vmem [#allocation2], %s247
        // Predicated region
        $region74: #{_stream_conv2d.1} parent=72 // pred_check
          %p249 = pneg %p50
        $region75: #{_stream_conv2d.1} parent=72 // pred_check_branch
          %251 = sbr.rel (%p249) target = $region77
        $region76: #{_stream_conv2d.1} parent=72 // pred_region
          _
        $region77: #{_stream_conv2d.1} parent=72 // pred_fallthru
          _
        %s252 = sand.u32 %s37, 1
        %s253 = sand.u32 %s37, 1
        %s254 = smul.addr %s253, 12
        %s255 = scalar_lea.vmem [#allocation2], %s254
        %p256 = pneg %p50
        %p257 = pneg %p47
        %p258 = pneg %p71
        %p259 = pneg %p68
        %p260 = pneg %p92
        %p261 = pneg %p89
        %p262 = scmp.lt.s32.totalorder %s20, 1
        %s263 = scalar_select %p262, %s20, 1
        %s264 = smul.addr %s263, 8
        %s265 = scalar_lea.vmem %s3, %s264
        %p266 = pneg %p118
        %p267 = pneg %p115
        %p268 = pneg %p146
        %p269 = pneg %p143
        %p270 = scmp.lt.s32.totalorder %s19, 1
        %s271 = scalar_select %p270, %s19, 1
        %p272 = scmp.lt.s32.totalorder %s20, 1
        %s273 = scalar_select %p272, %s20, 1
        %s274 = smul.addr %s271, 2
        %s275 = sadd.s32 %s273, %s274
        %s276 = smul.addr %s275, 8
        %s277 = scalar_lea.vmem %s4, %s276
        %p278 = scmp.lt.s32.totalorder %s20, 1
        %s279 = scalar_select %p278, %s20, 1
        %s280 = smul.addr %s279, 8
        %s281 = scalar_lea.vmem %s3, %s280
        %p282 = scmp.lt.s32.totalorder %s19, 1
        %s283 = scalar_select %p282, %s19, 1
        %p284 = scmp.lt.s32.totalorder %s20, 1
        %s285 = scalar_select %p284, %s20, 1
        %s286 = smul.addr %s283, 2
        %s287 = sadd.s32 %s285, %s286
        %s288 = smul.addr %s287, 8
        %s289 = scalar_lea.vmem %s4, %s288
        %v291 = vld [vmem:[%s248] sm:$0xf]
        %v292 = vld [vmem:[%s1] sm:$0xf]
        %v293 = vld [vmem:[%s1 + $0x4] sm:$0xf]
        %v294 = vld [vmem:[%s1 + $0x8] sm:$0xf]
        %v295 = vld [vmem:[%s1 + $0xc] sm:$0xf]
        %v296 = vld [vmem:[%s1 + $0x10] sm:$0xf]
        %v297 = vld [vmem:[%s1 + $0x14] sm:$0xf]
        %v298 = vld [vmem:[%s1 + $0x18] sm:$0xf]
        %v299 = vld [vmem:[%s1 + $0x1c] sm:$0xf]
        %s300 = scalar_lea.vmem %s248, 4 [#allocation2]
        %v301 = vld [vmem:[%s300] sm:$0xf]
        %s302 = scalar_lea.vmem %s1, 32
        %v303 = vld [vmem:[%s302] sm:$0xf]
        %v304 = vld [vmem:[%s302 + $0x4] sm:$0xf]
        %v305 = vld [vmem:[%s302 + $0x8] sm:$0xf]
        %v306 = vld [vmem:[%s302 + $0xc] sm:$0xf]
        %v307 = vld [vmem:[%s302 + $0x10] sm:$0xf]
        %v308 = vld [vmem:[%s302 + $0x14] sm:$0xf]
        %v309 = vld [vmem:[%s302 + $0x18] sm:$0xf]
        %v310 = vld [vmem:[%s302 + $0x1c] sm:$0xf]
        %v319 = vunpack.c.l.b16 %v303
        %v320 = vunpack.c.l.b16 %v304
        %v321 = vunpack.c.l.b16 %v305
        %v322 = vunpack.c.l.b16 %v306
        %v323 = vunpack.c.l.b16 %v307
        %v324 = vunpack.c.l.b16 %v308
        %v325 = vunpack.c.l.b16 %v309
        %v326 = vunpack.c.l.b16 %v310
        %v327 = vpack.c.b16 %v320, %v319
        %v328 = vpack.c.b16 %v322, %v321
        %v329 = vpack.c.b16 %v324, %v323
        %v330 = vpack.c.b16 %v326, %v325
        %vm335 = vcmask 523264
        %v337 = vsel %vm335, %v301, 0
        %339 = vmatpush.bf16.msra.mxu0 0
        %340 = vmatpush.bf16.msra.mxu0 0
        %341 = vmatpush.bf16.msra.mxu0 0
        %342 = vmatpush.bf16.msra.mxu0 0
        %343 = vmatpush.bf16.msra.mxu0 %v330
        %344 = vmatpush.bf16.msra.mxu0 %v329
        %345 = vmatpush.bf16.msra.mxu0 %v328
        %346 = vmatpush.bf16.msra.mxu0 %v327
        %347 = vmatmul.bf16.gmra.mxu0 %v337
        %v348 = vpop.f32.mrf.mxu0
        %v349 = vadd.f32 0.0, %v348
        %v350 = vpop.f32.mrf.mxu0
        %351 = vdwg.mxu0
        %v360 = vunpack.c.l.b16 %v292
        %v361 = vunpack.c.l.b16 %v293
        %v362 = vunpack.c.l.b16 %v294
        %v363 = vunpack.c.l.b16 %v295
        %v364 = vunpack.c.l.b16 %v296
        %v365 = vunpack.c.l.b16 %v297
        %v366 = vunpack.c.l.b16 %v298
        %v367 = vunpack.c.l.b16 %v299
        %v368 = vpack.c.b16 %v361, %v360
        %v369 = vpack.c.b16 %v363, %v362
        %v370 = vpack.c.b16 %v365, %v364
        %v371 = vpack.c.b16 %v367, %v366
        %v377 = vsel %vm335, %v291, 0
        %379 = vmatpush.bf16.msra.mxu0 0
        %380 = vmatpush.bf16.msra.mxu0 0
        %381 = vmatpush.bf16.msra.mxu0 0
        %382 = vmatpush.bf16.msra.mxu0 0
        %383 = vmatpush.bf16.msra.mxu0 %v371
        %384 = vmatpush.bf16.msra.mxu0 %v370
        %385 = vmatpush.bf16.msra.mxu0 %v369
        %386 = vmatpush.bf16.msra.mxu0 %v368
        %387 = vmatmul.bf16.gmra.mxu0 %v377
        %v388 = vpop.f32.mrf.mxu0
        %v389 = vadd.f32 %v349, %v388
        %v390 = vpop.f32.mrf.mxu0
        %391 = vdwg.mxu0
        %s392 = scalar_lea.vmem %s248, 8 [#allocation2]
        %v393 = vld [vmem:[%s392] sm:$0xf]
        %s394 = scalar_lea.vmem %s1, 64
        %v395 = vld [vmem:[%s394] sm:$0xf]
        %v396 = vld [vmem:[%s394 + $0x4] sm:$0xf]
        %v397 = vld [vmem:[%s394 + $0x8] sm:$0xf]
        %v398 = vld [vmem:[%s394 + $0xc] sm:$0xf]
        %v399 = vld [vmem:[%s394 + $0x10] sm:$0xf]
        %v400 = vld [vmem:[%s394 + $0x14] sm:$0xf]
        %v401 = vld [vmem:[%s394 + $0x18] sm:$0xf]
        %v402 = vld [vmem:[%s394 + $0x1c] sm:$0xf]
        %v411 = vunpack.c.l.b16 %v395
        %v412 = vunpack.c.l.b16 %v396
        %v413 = vunpack.c.l.b16 %v397
        %v414 = vunpack.c.l.b16 %v398
        %v415 = vunpack.c.l.b16 %v399
        %v416 = vunpack.c.l.b16 %v400
        %v417 = vunpack.c.l.b16 %v401
        %v418 = vunpack.c.l.b16 %v402
        %v419 = vpack.c.b16 %v412, %v411
        %v420 = vpack.c.b16 %v414, %v413
        %v421 = vpack.c.b16 %v416, %v415
        %v422 = vpack.c.b16 %v418, %v417
        %v428 = vsel %vm335, %v393, 0
        %430 = vmatpush.bf16.msra.mxu0 0
        %431 = vmatpush.bf16.msra.mxu0 0
        %432 = vmatpush.bf16.msra.mxu0 0
        %433 = vmatpush.bf16.msra.mxu0 0
        %434 = vmatpush.bf16.msra.mxu0 %v422
        %435 = vmatpush.bf16.msra.mxu0 %v421
        %436 = vmatpush.bf16.msra.mxu0 %v420
        %437 = vmatpush.bf16.msra.mxu0 %v419
        %438 = vmatmul.bf16.gmra.mxu0 %v428
        %v439 = vpop.f32.mrf.mxu0
        %v440 = vadd.f32 0.0, %v439
        %v441 = vpop.f32.mrf.mxu0
        %442 = vdwg.mxu0
        %v443 = vadd.f32 %v389, %v440
        %v444 = vld [vmem:[%s2] sm:$0x1]
        %v446 = vperm.slane %v444, 0
        %v448 = vadd.f32 %v443, %v446
        %v449 = vld [vmem:[%s281] sm:$0xff]
        %451 = vset.pattern.permute.xlu0 0
        %452 = vperm.xlu0 %451, %v449
        %v453 = vpop.permute.xlu0 %452
        %v455 = vmul.f32 %v448, %v453
        %vm456 = vcmask 916480
        %457 = vst.msk [vmem:[%s289] sm:$0xff] %vm456, %v455
        %p458 = scmp.lt.s32.totalorder %s19, 1
        %s459 = scalar_select %p458, %s19, 1
        %p460 = scmp.lt.s32.totalorder %s20, 1
        %s461 = scalar_select %p460, %s20, 1
        %s462 = smul.addr %s459, 2
        %s463 = sadd.s32 %s461, %s462
        %s464 = smul.addr %s463, 8
        %s465 = scalar_lea.vmem %s4, %s464
        // Predicated region
        $region78: #{_stream_conv2d.1} parent=72 // pred_check
          %p466 = pneg %p143
        $region79: #{_stream_conv2d.1} parent=72 // pred_check_branch
          %468 = sbr.rel (%p466) target = $region81
        $region80: #{_stream_conv2d.1} parent=72 // pred_region
          _
        $region81: #{_stream_conv2d.1} parent=72 // pred_fallthru
          _
      $region73: #{_stream_conv2d.1} parent=5 // pred_fallthru
        _
      %p469 = scmp.le.s32.totalorder 2, %s10
      // Predicated region
      $region82: #{_stream_conv2d.1} parent=5 // pred_check
        %p470 = pneg %p469
      $region83: #{_stream_conv2d.1} parent=5 // pred_check_branch
        %472 = sbr.rel (%p470) target = $region85
      $region84: #{_stream_conv2d.1} parent=5 // pred_region
        %s473 = ssub.s32 %s10, 2
        // Predicated region
        $region86: #{_stream_conv2d.1} parent=84 // pred_check
          %p474 = pneg %p149
        $region87: #{_stream_conv2d.1} parent=84 // pred_check_branch
          %476 = sbr.rel (%p474) target = $region89
        $region88: #{_stream_conv2d.1} parent=84 // pred_region
          %p477 = scmp.lt.s32.totalorder %s21, 1
          %s478 = scalar_select %p477, %s21, 1
          %p479 = scmp.lt.s32.totalorder %s22, 1
          %s480 = scalar_select %p479, %s22, 1
          %s481 = smul.addr %s478, 2
          %s482 = sadd.s32 %s480, %s481
          %s483 = smul.addr %s482, 8
          %s484 = scalar_lea.vmem %s4, %s483
        $region89: #{_stream_conv2d.1} parent=84 // pred_fallthru
          _
      $region85: #{_stream_conv2d.1} parent=5 // pred_fallthru
        _
    $region6: #{_stream_conv2d.1} parent=1 // loop_footer
      %s14 = sadd.s32 1, %s10
    $region7: #{_stream_conv2d.1} parent=1 // loop_footer_branch
      %9 = sbr.rel target = $region3
    $region8: #{_stream_conv2d.1} parent=1 // loop_exit
      _

</llo_original>
